<compile_context>
chip_gen: v5e
topology: v5e:2x2
jax: 0.10.0
libtpu: 0.0.40
codegen_flags: <defaults>
</compile_context>

<pallas_src>
import functools

import jax
import jax.numpy as jnp
from jax.experimental import pallas as pl
from jax.experimental.pallas import tpu as pltpu

_INV_SQRT2 = 0.7071067811865476
_SQRT_2_OVER_PI = 0.7978845608028654


def _round_up(v, m):
    return (v + m - 1) // m * m


def _gelu(z, exact):
    if exact:
        return 0.5 * z * (1.0 + jax.lax.erf(z * _INV_SQRT2))       # PyTorch default GELU
    # tanh approximation: tanh goes to the (otherwise idle) EUP slot instead of a VPU polynomial
    return 0.5 * z * (1.0 + jnp.tanh(_SQRT_2_OVER_PI * (z + 0.044715 * z * z * z)))


def _seg_block_kernel_scalar(x_ref, w_ref, b_ref, corr_ref, gamma_ref, beta_ref, out_ref,
                             *, kernel_size, batch, lane_halo, eps, exact_gelu, one_pass,
                             windowed):
    """VPU path (small K).  out_ref: (K, B_pad, TL); window-element index j is the leading axis."""
    K = kernel_size
    TL = out_ref.shape[2]

    if windowed:
        xw = x_ref[0]                                            # (B_pad, TL + lane_halo)
    else:
        base = pl.multiple_of(pl.program_id(0) * TL, 128)        # 128-aligned element offset
        xw = x_ref[:, pl.ds(base, TL + lane_halo)]
    xs = [xw[:, k:k + TL] for k in range(K)]                     # K shifted (B_pad, TL) slices

    B_pad = out_ref.shape[1]
    has_pad = B_pad != batch
    n_pad = float(B_pad - batch)
    inv_n = 1.0 / float(batch * K)
    S1 = corr_ref[0]                                             # sum_j gelu(b_eff[j])
    S2 = corr_ref[1]                                             # sum_j gelu(b_eff[j])^2

    # pass 1: Linear (+ folded PE/bias) -> GELU, streamed through out_ref; accumulate BN sums.
    s = None
    ss = None
    for j in range(K):
        z = xs[0] * w_ref[j, 0] + b_ref[j]
        for k in range(1, K):
            z = z + xs[k] * w_ref[j, k]
        g = _gelu(z, exact_gelu)
        out_ref[j] = g.astype(out_ref.dtype)
        col = g.sum(axis=0, keepdims=True)                       # (1, TL)
        s = col if s is None else s + col
        if one_pass:
            col2 = (g * g).sum(axis=0, keepdims=True)
            ss = col2 if ss is None else ss + col2

    if has_pad:                                                  # padded rows contribute gelu(b)
        s = s - n_pad * S1
    mean = s * inv_n                                             # (1, TL)

    if one_pass:
        if has_pad:
            ss = ss - n_pad * S2
        var = ss * inv_n - mean * mean
    else:
        # pass 2: two-pass centered variance (matches PyTorch numerics), re-reading g from out_ref.
        ss = None
        for j in range(K):
            d = out_ref[j].astype(jnp.float32) - mean
            col = (d * d).sum(axis=0, keepdims=True)
            ss = col if ss is None else ss + col
        if has_pad:
            ss = ss - n_pad * (S2 - 2.0 * mean * S1 + float(K) * (mean * mean))
        var = ss * inv_n

    # pass 3: fused affine  out = g*scale + shift
    scale = jax.lax.rsqrt(var + eps) * gamma_ref[...]
    shift = beta_ref[...] - mean * scale
    for j in range(K):
        out_ref[j] = (out_ref[j].astype(jnp.float32) * scale + shift).astype(out_ref.dtype)


def _seg_block_kernel_mxu(x_ref, w_ref, b_ref, corr_ref, gamma_ref, beta_ref, out_ref,
                          *, kernel_size, batch, lane_halo, eps, exact_gelu, one_pass,
                          windowed):
    """MXU path (K >= 16).  out_ref: (B_pad, K, TL) -- window index on sublanes, L on lanes."""
    K = kernel_size
    B_pad = out_ref.shape[0]
    TL = out_ref.shape[2]

    if windowed:
        xw = x_ref[0]
    else:
        base = pl.multiple_of(pl.program_id(0) * TL, 128)
        xw = x_ref[:, pl.ds(base, TL + lane_halo)]

    # (B_pad, K, TL): window element k moved onto the sublane axis so the MXU can contract over it.
    xs2 = jnp.stack([xw[:, k:k + TL] for k in range(K)], axis=1)

    # One batched (K,K)@(K,TL) matmul per batch row on the MXU (the VALU was the saturating slot).
    wb = jnp.broadcast_to(w_ref[...], (B_pad, K, K))
    z = jax.lax.dot_general(wb, xs2,
                            dimension_numbers=(((2,), (1,)), ((0,), (0,))),
                            preferred_element_type=jnp.float32)          # (B_pad, K, TL)
    z = z + b_ref[...]                                                   # bias (+PE) (1, K, 1)
    g = _gelu(z, exact_gelu)

    has_pad = B_pad != batch
    n_pad = float(B_pad - batch)
    inv_n = 1.0 / float(batch * K)
    S1 = corr_ref[0]
    S2 = corr_ref[1]

    s = jnp.sum(g, axis=(0, 1), keepdims=True)                           # (1, 1, TL)
    if has_pad:
        s = s - n_pad * S1
    mean = s * inv_n
    if one_pass:
        ss = jnp.sum(g * g, axis=(0, 1), keepdims=True)
        if has_pad:
            ss = ss - n_pad * S2
        var = ss * inv_n - mean * mean
    else:
        d = g - mean
        ss = jnp.sum(d * d, axis=(0, 1), keepdims=True)
        if has_pad:
            ss = ss - n_pad * (S2 - 2.0 * mean * S1 + float(K) * (mean * mean))
        var = ss * inv_n

    scale = jax.lax.rsqrt(var + eps) * gamma_ref[...].reshape(1, 1, TL)
    shift = beta_ref[...].reshape(1, 1, TL) - mean * scale
    out_ref[...] = (g * scale + shift).astype(out_ref.dtype)


def segmentation_block(x, pe, w_eff, bias, gamma, beta, *, kernel_size, eps=1e-5,
                       transpose_output=True, exact_gelu=True, one_pass_stats=False,
                       out_dtype=jnp.float32, use_mxu=None, force_windowed=False):
    """SegmentationBlock forward.

    Returns the PyTorch (B, L, K) layout by default.  transpose_output=False returns the
    kernel-native layout ((K, B, L) for the VPU path, (B, K, L) for the MXU path) and skips the
    HBM re-stream of the (K x input sized) output that the layout transpose costs.
    """
    B, F = x.shape
    K = kernel_size
    L = F - K + 1
    assert L >= 1
    assert 1 <= K <= 128, "kernel_size assumed <= 128"
    if use_mxu is None:
        use_mxu = K >= 16

    f32 = jnp.float32
    x = x.astype(f32)
    w_eff = w_eff.astype(f32)

    # Fold the learnable positional encoding into the Linear bias:
    #   (u + pe) @ W.T + bias == u @ W.T + (bias + W @ pe)
    b_eff = bias.astype(f32) + w_eff @ pe.astype(f32)                    # (K,)

    # Padded batch rows of x are all-zero, so each of their GELU planes is the constant
    # gelu(b_eff[j]).  Precompute the two sums needed to subtract their exact contribution from
    # the BatchNorm statistics (replaces the old full-plane mask multiplies).
    gp = _gelu(b_eff, exact_gelu)
    corr = jnp.stack([jnp.sum(gp), jnp.sum(gp * gp)]).astype(f32)        # (2,) -> SMEM

    B_pad = _round_up(B, 8)
    lane_halo = _round_up(K - 1, 128) if K > 1 else 0                    # 128-aligned overlap halo
    out_itemsize = jnp.dtype(out_dtype).itemsize

    # generation-aware VMEM budget (v7x: 64 MiB physical; v5e/v6e: 128 MiB)
    try:
        vmem_cap = int(getattr(pltpu.get_tpu_info(), "vmem_capacity_bytes", 64 * 2 ** 20))
    except Exception:
        vmem_cap = 64 * 2 ** 20
    budget = 24 * 2 ** 20 if vmem_cap <= 64 * 2 ** 20 else 56 * 2 ** 20

    def tile_bytes(tl, windowed_mode):
        out_blk = K * B_pad * tl * out_itemsize * 2                      # double-buffered out tile
        if windowed_mode:
            x_term = B_pad * (tl + lane_halo) * 4 * 2                    # per-tile halo window
        else:
            x_term = B_pad * (_round_up(L, tl) + lane_halo) * 4 * 2      # resident x (counted x2)
        tmp = (3 if use_mxu else 1) * K * B_pad * tl * 4 + 4 * B_pad * tl * 4  # in-kernel temps
        affine = 4 * tl * 4 * 2                                          # gamma/beta tiles
        return out_blk + x_term + tmp + affine

    resident_x = B_pad * (_round_up(L, 128) + lane_halo) * 4 * 2
    windowed = bool(force_windowed) or resident_x > budget // 3

    # largest lane-dense tile that fits the budget without excessive L padding
    TL = 128
    for cand in (2048, 1024, 512, 256, 128):
        if tile_bytes(cand, windowed) > budget:
            continue
        l_pad_c = _round_up(L, cand)
        if (l_pad_c - L) / l_pad_c <= 0.25 or cand == 128:
            TL = cand
            break
    while TL > 128 and _round_up(L, TL) // TL < 2:                       # >=2 L-tiles for v7x's 2 TCs
        TL //= 2

    L_pad = _round_up(L, TL)
    n_tiles = L_pad // TL
    TW = TL + lane_halo
    F_pad = L_pad + lane_halo

    x_p = jnp.pad(x, ((0, B_pad - B), (0, F_pad - F)))
    gamma_p = jnp.pad(gamma.astype(f32).reshape(1, L), ((0, 0), (0, L_pad - L)))
    beta_p = jnp.pad(beta.astype(f32).reshape(1, L), ((0, 0), (0, L_pad - L)))

    if windowed:
        # Large-input escape hatch: pre-slice per-tile halo windows so the kernel's x footprint is
        # O(TL) (standard pipelined BlockSpec) instead of keeping all of x resident in VMEM.
        x_in = jnp.stack(
            [jax.lax.dynamic_slice(x_p, (0, i * TL), (B_pad, TW)) for i in range(n_tiles)], axis=0)
        x_spec = pl.BlockSpec((1, B_pad, TW), lambda i: (i, 0, 0))
    else:
        x_in = x_p
        x_spec = pl.BlockSpec((B_pad, F_pad), lambda i: (0, 0))          # resident, DMA'd once

    vmem_limit = int(min(int(vmem_cap * 0.9),
                         max(32 * 2 ** 20, 2 * tile_bytes(TL, windowed))))
    cparams = pltpu.CompilerParams(dimension_semantics=("parallel",),
                                   vmem_limit_bytes=vmem_limit)

    if use_mxu:
        kern = functools.partial(_seg_block_kernel_mxu, kernel_size=K, batch=B,
                                 lane_halo=lane_halo, eps=eps, exact_gelu=exact_gelu,
                                 one_pass=one_pass_stats, windowed=windowed)
        out_pad = pl.pallas_call(
            kern,
            out_shape=jax.ShapeDtypeStruct((B_pad, K, L_pad), out_dtype),
            grid=(n_tiles,),
            in_specs=[
                x_spec,
                pl.BlockSpec((K, K), lambda i: (0, 0)),                  # W_eff in VMEM -> MXU
                pl.BlockSpec((1, K, 1), lambda i: (0, 0, 0)),            # bias (+PE) column
                pl.BlockSpec(memory_space=pltpu.MemorySpace.SMEM),       # (S1, S2) pad-row corr.
                pl.BlockSpec((1, TL), lambda i: (0, i)),                 # gamma tile
                pl.BlockSpec((1, TL), lambda i: (0, i)),                 # beta tile
            ],
            out_specs=pl.BlockSpec((B_pad, K, TL), lambda i: (0, 0, i)),
            compiler_params=cparams,
        )(x_in, w_eff, b_eff.reshape(1, K, 1), corr, gamma_p, beta_p)
        out_native = out_pad[:B, :, :L]                                  # (B, K, L)
        if not transpose_output:
            return out_native
        return jnp.transpose(out_native, (0, 2, 1))                      # (B, L, K)

    kern = functools.partial(_seg_block_kernel_scalar, kernel_size=K, batch=B,
                             lane_halo=lane_halo, eps=eps, exact_gelu=exact_gelu,
                             one_pass=one_pass_stats, windowed=windowed)
    out_pad = pl.pallas_call(
        kern,
        out_shape=jax.ShapeDtypeStruct((K, B_pad, L_pad), out_dtype),
        grid=(n_tiles,),
        in_specs=[
            x_spec,
            pl.BlockSpec(memory_space=pltpu.MemorySpace.SMEM),           # W_eff (K, K) scalars
            pl.BlockSpec(memory_space=pltpu.MemorySpace.SMEM),           # b_eff (K,)   scalars
            pl.BlockSpec(memory_space=pltpu.MemorySpace.SMEM),           # (S1, S2) pad-row corr.
            pl.BlockSpec((1, TL), lambda i: (0, i)),                     # gamma tile
            pl.BlockSpec((1, TL), lambda i: (0, i)),                     # beta tile
        ],
        out_specs=pl.BlockSpec((K, B_pad, TL), lambda i: (0, 0, i)),
        compiler_params=cparams,
    )(x_in, w_eff, b_eff, corr, gamma_p, beta_p)
    out_native = out_pad[:, :B, :L]                                      # (K, B, L)
    if not transpose_output:
        return out_native
    return jnp.transpose(out_native, (1, 2, 0))                          # (B, L, K)


def reference(x, pe, w_eff, bias, gamma, beta, *, kernel_size, eps=1e-5, exact_gelu=True):
    """Plain-JAX reference mirroring the PyTorch forward (training-mode BatchNorm)."""
    B, F = x.shape
    K = kernel_size
    L = F - K + 1
    y = jnp.stack([x[:, l:l + K] for l in range(L)], axis=1)             # (B, L, K) == torch.unfold
    y = y + pe                                                            # positional encoding
    z = jnp.matmul(y, w_eff.T, precision=jax.lax.Precision.HIGHEST) + bias
    g = _gelu(z, exact_gelu)
    mean = g.mean(axis=(0, 2), keepdims=True)
    var = ((g - mean) ** 2).mean(axis=(0, 2), keepdims=True)
    return (g - mean) / jnp.sqrt(var + eps) * gamma.reshape(1, L, 1) + beta.reshape(1, L, 1)


if __name__ == "__main__":
    def run_case(name, *, batch, in_features, K, tol=1e-5, **kw):
        L = in_features - K + 1
        key = jax.random.PRNGKey(0)
        kx, kpe, kv, kg, kb, kgam, kbet = jax.random.split(key, 7)

        x = jax.random.normal(kx, (batch, in_features), dtype=jnp.float32)
        pe = (0.02 * jax.random.normal(kpe, (K,))).astype(jnp.float32)
        # weight_norm(nn.Linear(K, K)): fold g * v / ||v||_row into an effective weight (wrapper glue)
        v = (jax.random.normal(kv, (K, K)) / jnp.sqrt(K)).astype(jnp.float32)
        g_wn = jax.random.uniform(kg, (K,), minval=0.5, maxval=1.5).astype(jnp.float32)
        w_eff = g_wn[:, None] * v / jnp.linalg.norm(v, axis=1, keepdims=True)
        bias = (0.1 * jax.random.normal(kb, (K,))).astype(jnp.float32)
        # BatchNorm1d(L) affine params.
        # TODO(synk): BatchNorm1d running_mean/running_var updates are a training-time side effect
        # and are not materialized here (training-mode forward output is unaffected).
        gamma = (1.0 + 0.1 * jax.random.normal(kgam, (L,))).astype(jnp.float32)
        beta = (0.1 * jax.random.normal(kbet, (L,))).astype(jnp.float32)

        exact_gelu = kw.get("exact_gelu", True)
        out = segmentation_block(x, pe, w_eff, bias, gamma, beta, kernel_size=K, **kw)
        out = jax.block_until_ready(out)
        ref = reference(x, pe, w_eff, bias, gamma, beta, kernel_size=K, exact_gelu=exact_gelu)
        assert out.shape == (batch, L, K), (name, out.shape)
        err = float(jnp.max(jnp.abs(out - ref)))
        assert err <= tol, (name, err)

    # 1) module default scale (kernel_size=4): VPU scalar path, resident x, exact GELU, two-pass BN
    run_case("scalar_resident", batch=2, in_features=16, K=4)
    # 2) K >= 16: MXU path (batched dot over the stacked window slices), W_eff in VMEM
    run_case("mxu_resident", batch=4, in_features=48, K=16, tol=1e-4)
    # 3) windowed-x escape hatch + one-pass stats + tanh GELU flags
    run_case("scalar_windowed_onepass_tanh", batch=3, in_features=20, K=4,
             force_windowed=True, one_pass_stats=True, exact_gelu=False, tol=1e-4)

    print("KERNEL_OK")
</pallas_src>

<mosaic_0001>
module attributes {stable_mosaic.version = 11 : i64} {
  func.func @_seg_block_kernel_scalar(%arg0: i32, %arg1: memref<8x256xf32, #tpu.memory_space<vmem>>, %arg2: memref<4x4xf32, #tpu.memory_space<smem>>, %arg3: memref<4xf32, #tpu.memory_space<smem>>, %arg4: memref<2xf32, #tpu.memory_space<smem>>, %arg5: memref<1x128xf32, #tpu.memory_space<vmem>>, %arg6: memref<1x128xf32, #tpu.memory_space<vmem>>, %arg7: memref<4x8x128xf32, #tpu.memory_space<vmem>>) attributes {dimension_semantics = [#tpu.dimension_semantics<parallel>], iteration_bounds = array<i64: 1>, scalar_prefetch = 0 : i64, scratch_operands = 0 : i64, tpu.core_type = #tpu.core_type<tc>, window_params = [{pipeline_mode = #tpu.pipeline_mode<synchronous>, transform_indices = @transform_0, window_bounds = array<i64: 8, 256>}, {transform_indices = @transform_1, window_bounds = array<i64: 4, 4>}, {transform_indices = @transform_2, window_bounds = array<i64: 4>}, {transform_indices = @transform_3, window_bounds = array<i64: 2>}, {transform_indices = @transform_4, window_bounds = array<i64: 1, 128>}, {transform_indices = @transform_5, window_bounds = array<i64: 1, 128>}, {transform_indices = @transform_6, window_bounds = array<i64: 4, 8, 128>}]} {
    %c128_i32 = arith.constant 128 : i32
    %0 = arith.muli %arg0, %c128_i32 : i32
    %1 = tpu.assume_multiple %0, 128 : i32
    %c0 = arith.constant 0 : index
    %2 = arith.index_cast %1 : i32 to index
    %3 = vector.load %arg1[%c0, %2] : memref<8x256xf32, #tpu.memory_space<vmem>>, vector<8x256xf32>
    %4 = vector.extract_strided_slice %3 {offsets = [0, 0], sizes = [8, 128], strides = [1, 1]} : vector<8x256xf32> to vector<8x128xf32>
    %5 = vector.extract_strided_slice %3 {offsets = [0, 1], sizes = [8, 128], strides = [1, 1]} : vector<8x256xf32> to vector<8x128xf32>
    %6 = vector.extract_strided_slice %3 {offsets = [0, 2], sizes = [8, 128], strides = [1, 1]} : vector<8x256xf32> to vector<8x128xf32>
    %7 = vector.extract_strided_slice %3 {offsets = [0, 3], sizes = [8, 128], strides = [1, 1]} : vector<8x256xf32> to vector<8x128xf32>
    %c0_0 = arith.constant 0 : index
    %8 = memref.load %arg4[%c0_0] : memref<2xf32, #tpu.memory_space<smem>>
    %c1 = arith.constant 1 : index
    %9 = memref.load %arg4[%c1] : memref<2xf32, #tpu.memory_space<smem>>
    %c0_1 = arith.constant 0 : index
    %c0_2 = arith.constant 0 : index
    %10 = memref.load %arg2[%c0_1, %c0_2] : memref<4x4xf32, #tpu.memory_space<smem>>
    %11 = vector.broadcast %10 : f32 to vector<8x128xf32>
    %12 = arith.mulf %4, %11 : vector<8x128xf32>
    %c0_3 = arith.constant 0 : index
    %13 = memref.load %arg3[%c0_3] : memref<4xf32, #tpu.memory_space<smem>>
    %14 = vector.broadcast %13 : f32 to vector<8x128xf32>
    %15 = arith.addf %12, %14 : vector<8x128xf32>
    %c0_4 = arith.constant 0 : index
    %c1_5 = arith.constant 1 : index
    %16 = memref.load %arg2[%c0_4, %c1_5] : memref<4x4xf32, #tpu.memory_space<smem>>
    %17 = vector.broadcast %16 : f32 to vector<8x128xf32>
    %18 = arith.mulf %5, %17 : vector<8x128xf32>
    %19 = arith.addf %15, %18 : vector<8x128xf32>
    %c0_6 = arith.constant 0 : index
    %c2 = arith.constant 2 : index
    %20 = memref.load %arg2[%c0_6, %c2] : memref<4x4xf32, #tpu.memory_space<smem>>
    %21 = vector.broadcast %20 : f32 to vector<8x128xf32>
    %22 = arith.mulf %6, %21 : vector<8x128xf32>
    %23 = arith.addf %19, %22 : vector<8x128xf32>
    %c0_7 = arith.constant 0 : index
    %c3 = arith.constant 3 : index
    %24 = memref.load %arg2[%c0_7, %c3] : memref<4x4xf32, #tpu.memory_space<smem>>
    %25 = vector.broadcast %24 : f32 to vector<8x128xf32>
    %26 = arith.mulf %7, %25 : vector<8x128xf32>
    %27 = arith.addf %23, %26 : vector<8x128xf32>
    %cst = arith.constant 5.000000e-01 : f32
    %28 = vector.broadcast %cst : f32 to vector<8x128xf32>
    %29 = arith.mulf %28, %27 : vector<8x128xf32>
    %cst_8 = arith.constant 0.707106769 : f32
    %30 = vector.broadcast %cst_8 : f32 to vector<8x128xf32>
    %31 = arith.mulf %27, %30 : vector<8x128xf32>
    %32 = math.erf %31 : vector<8x128xf32>
    %cst_9 = arith.constant 1.000000e+00 : f32
    %33 = vector.broadcast %cst_9 : f32 to vector<8x128xf32>
    %34 = arith.addf %33, %32 : vector<8x128xf32>
    %35 = arith.mulf %29, %34 : vector<8x128xf32>
    %c0_10 = arith.constant 0 : index
    %c0_11 = arith.constant 0 : index
    %c0_12 = arith.constant 0 : index
    %36 = vector.load %arg7[%c0_10, %c0_11, %c0_12] : memref<4x8x128xf32, #tpu.memory_space<vmem>>, vector<1x8x128xf32>
    %37 = vector.shape_cast %36 : vector<1x8x128xf32> to vector<8x128xf32>
    %38 = vector.shape_cast %35 : vector<8x128xf32> to vector<1x8x128xf32>
    tpu.vector_store %arg7[%c0_10, %c0_11, %c0_12], %38 {strides = array<i32>} : memref<4x8x128xf32, #tpu.memory_space<vmem>>, vector<1x8x128xf32>,
    %cst_13 = arith.constant dense<0.000000e+00> : vector<128xf32>
    %39 = vector.multi_reduction <add>, %35, %cst_13 [0] : vector<8x128xf32> to vector<128xf32>
    %40 = vector.shape_cast %39 : vector<128xf32> to vector<1x128xf32>
    %c1_14 = arith.constant 1 : index
    %c0_15 = arith.constant 0 : index
    %41 = memref.load %arg2[%c1_14, %c0_15] : memref<4x4xf32, #tpu.memory_space<smem>>
    %42 = vector.broadcast %41 : f32 to vector<8x128xf32>
    %43 = arith.mulf %4, %42 : vector<8x128xf32>
    %c1_16 = arith.constant 1 : index
    %44 = memref.load %arg3[%c1_16] : memref<4xf32, #tpu.memory_space<smem>>
    %45 = vector.broadcast %44 : f32 to vector<8x128xf32>
    %46 = arith.addf %43, %45 : vector<8x128xf32>
    %c1_17 = arith.constant 1 : index
    %c1_18 = arith.constant 1 : index
    %47 = memref.load %arg2[%c1_17, %c1_18] : memref<4x4xf32, #tpu.memory_space<smem>>
    %48 = vector.broadcast %47 : f32 to vector<8x128xf32>
    %49 = arith.mulf %5, %48 : vector<8x128xf32>
    %50 = arith.addf %46, %49 : vector<8x128xf32>
    %c1_19 = arith.constant 1 : index
    %c2_20 = arith.constant 2 : index
    %51 = memref.load %arg2[%c1_19, %c2_20] : memref<4x4xf32, #tpu.memory_space<smem>>
    %52 = vector.broadcast %51 : f32 to vector<8x128xf32>
    %53 = arith.mulf %6, %52 : vector<8x128xf32>
    %54 = arith.addf %50, %53 : vector<8x128xf32>
    %c1_21 = arith.constant 1 : index
    %c3_22 = arith.constant 3 : index
    %55 = memref.load %arg2[%c1_21, %c3_22] : memref<4x4xf32, #tpu.memory_space<smem>>
    %56 = vector.broadcast %55 : f32 to vector<8x128xf32>
    %57 = arith.mulf %7, %56 : vector<8x128xf32>
    %58 = arith.addf %54, %57 : vector<8x128xf32>
    %cst_23 = arith.constant 5.000000e-01 : f32
    %59 = vector.broadcast %cst_23 : f32 to vector<8x128xf32>
    %60 = arith.mulf %59, %58 : vector<8x128xf32>
    %cst_24 = arith.constant 0.707106769 : f32
    %61 = vector.broadcast %cst_24 : f32 to vector<8x128xf32>
    %62 = arith.mulf %58, %61 : vector<8x128xf32>
    %63 = math.erf %62 : vector<8x128xf32>
    %cst_25 = arith.constant 1.000000e+00 : f32
    %64 = vector.broadcast %cst_25 : f32 to vector<8x128xf32>
    %65 = arith.addf %64, %63 : vector<8x128xf32>
    %66 = arith.mulf %60, %65 : vector<8x128xf32>
    %c1_26 = arith.constant 1 : index
    %c0_27 = arith.constant 0 : index
    %c0_28 = arith.constant 0 : index
    %67 = vector.load %arg7[%c1_26, %c0_27, %c0_28] : memref<4x8x128xf32, #tpu.memory_space<vmem>>, vector<1x8x128xf32>
    %68 = vector.shape_cast %67 : vector<1x8x128xf32> to vector<8x128xf32>
    %69 = vector.shape_cast %66 : vector<8x128xf32> to vector<1x8x128xf32>
    tpu.vector_store %arg7[%c1_26, %c0_27, %c0_28], %69 {strides = array<i32>} : memref<4x8x128xf32, #tpu.memory_space<vmem>>, vector<1x8x128xf32>,
    %cst_29 = arith.constant dense<0.000000e+00> : vector<128xf32>
    %70 = vector.multi_reduction <add>, %66, %cst_29 [0] : vector<8x128xf32> to vector<128xf32>
    %71 = vector.shape_cast %70 : vector<128xf32> to vector<1x128xf32>
    %72 = arith.addf %40, %71 : vector<1x128xf32>
    %c2_30 = arith.constant 2 : index
    %c0_31 = arith.constant 0 : index
    %73 = memref.load %arg2[%c2_30, %c0_31] : memref<4x4xf32, #tpu.memory_space<smem>>
    %74 = vector.broadcast %73 : f32 to vector<8x128xf32>
    %75 = arith.mulf %4, %74 : vector<8x128xf32>
    %c2_32 = arith.constant 2 : index
    %76 = memref.load %arg3[%c2_32] : memref<4xf32, #tpu.memory_space<smem>>
    %77 = vector.broadcast %76 : f32 to vector<8x128xf32>
    %78 = arith.addf %75, %77 : vector<8x128xf32>
    %c2_33 = arith.constant 2 : index
    %c1_34 = arith.constant 1 : index
    %79 = memref.load %arg2[%c2_33, %c1_34] : memref<4x4xf32, #tpu.memory_space<smem>>
    %80 = vector.broadcast %79 : f32 to vector<8x128xf32>
    %81 = arith.mulf %5, %80 : vector<8x128xf32>
    %82 = arith.addf %78, %81 : vector<8x128xf32>
    %c2_35 = arith.constant 2 : index
    %c2_36 = arith.constant 2 : index
    %83 = memref.load %arg2[%c2_35, %c2_36] : memref<4x4xf32, #tpu.memory_space<smem>>
    %84 = vector.broadcast %83 : f32 to vector<8x128xf32>
    %85 = arith.mulf %6, %84 : vector<8x128xf32>
    %86 = arith.addf %82, %85 : vector<8x128xf32>
    %c2_37 = arith.constant 2 : index
    %c3_38 = arith.constant 3 : index
    %87 = memref.load %arg2[%c2_37, %c3_38] : memref<4x4xf32, #tpu.memory_space<smem>>
    %88 = vector.broadcast %87 : f32 to vector<8x128xf32>
    %89 = arith.mulf %7, %88 : vector<8x128xf32>
    %90 = arith.addf %86, %89 : vector<8x128xf32>
    %cst_39 = arith.constant 5.000000e-01 : f32
    %91 = vector.broadcast %cst_39 : f32 to vector<8x128xf32>
    %92 = arith.mulf %91, %90 : vector<8x128xf32>
    %cst_40 = arith.constant 0.707106769 : f32
    %93 = vector.broadcast %cst_40 : f32 to vector<8x128xf32>
    %94 = arith.mulf %90, %93 : vector<8x128xf32>
    %95 = math.erf %94 : vector<8x128xf32>
    %cst_41 = arith.constant 1.000000e+00 : f32
    %96 = vector.broadcast %cst_41 : f32 to vector<8x128xf32>
    %97 = arith.addf %96, %95 : vector<8x128xf32>
    %98 = arith.mulf %92, %97 : vector<8x128xf32>
    %c2_42 = arith.constant 2 : index
    %c0_43 = arith.constant 0 : index
    %c0_44 = arith.constant 0 : index
    %99 = vector.load %arg7[%c2_42, %c0_43, %c0_44] : memref<4x8x128xf32, #tpu.memory_space<vmem>>, vector<1x8x128xf32>
    %100 = vector.shape_cast %99 : vector<1x8x128xf32> to vector<8x128xf32>
    %101 = vector.shape_cast %98 : vector<8x128xf32> to vector<1x8x128xf32>
    tpu.vector_store %arg7[%c2_42, %c0_43, %c0_44], %101 {strides = array<i32>} : memref<4x8x128xf32, #tpu.memory_space<vmem>>, vector<1x8x128xf32>,
    %cst_45 = arith.constant dense<0.000000e+00> : vector<128xf32>
    %102 = vector.multi_reduction <add>, %98, %cst_45 [0] : vector<8x128xf32> to vector<128xf32>
    %103 = vector.shape_cast %102 : vector<128xf32> to vector<1x128xf32>
    %104 = arith.addf %72, %103 : vector<1x128xf32>
    %c3_46 = arith.constant 3 : index
    %c0_47 = arith.constant 0 : index
    %105 = memref.load %arg2[%c3_46, %c0_47] : memref<4x4xf32, #tpu.memory_space<smem>>
    %106 = vector.broadcast %105 : f32 to vector<8x128xf32>
    %107 = arith.mulf %4, %106 : vector<8x128xf32>
    %c3_48 = arith.constant 3 : index
    %108 = memref.load %arg3[%c3_48] : memref<4xf32, #tpu.memory_space<smem>>
    %109 = vector.broadcast %108 : f32 to vector<8x128xf32>
    %110 = arith.addf %107, %109 : vector<8x128xf32>
    %c3_49 = arith.constant 3 : index
    %c1_50 = arith.constant 1 : index
    %111 = memref.load %arg2[%c3_49, %c1_50] : memref<4x4xf32, #tpu.memory_space<smem>>
    %112 = vector.broadcast %111 : f32 to vector<8x128xf32>
    %113 = arith.mulf %5, %112 : vector<8x128xf32>
    %114 = arith.addf %110, %113 : vector<8x128xf32>
    %c3_51 = arith.constant 3 : index
    %c2_52 = arith.constant 2 : index
    %115 = memref.load %arg2[%c3_51, %c2_52] : memref<4x4xf32, #tpu.memory_space<smem>>
    %116 = vector.broadcast %115 : f32 to vector<8x128xf32>
    %117 = arith.mulf %6, %116 : vector<8x128xf32>
    %118 = arith.addf %114, %117 : vector<8x128xf32>
    %c3_53 = arith.constant 3 : index
    %c3_54 = arith.constant 3 : index
    %119 = memref.load %arg2[%c3_53, %c3_54] : memref<4x4xf32, #tpu.memory_space<smem>>
    %120 = vector.broadcast %119 : f32 to vector<8x128xf32>
    %121 = arith.mulf %7, %120 : vector<8x128xf32>
    %122 = arith.addf %118, %121 : vector<8x128xf32>
    %cst_55 = arith.constant 5.000000e-01 : f32
    %123 = vector.broadcast %cst_55 : f32 to vector<8x128xf32>
    %124 = arith.mulf %123, %122 : vector<8x128xf32>
    %cst_56 = arith.constant 0.707106769 : f32
    %125 = vector.broadcast %cst_56 : f32 to vector<8x128xf32>
    %126 = arith.mulf %122, %125 : vector<8x128xf32>
    %127 = math.erf %126 : vector<8x128xf32>
    %cst_57 = arith.constant 1.000000e+00 : f32
    %128 = vector.broadcast %cst_57 : f32 to vector<8x128xf32>
    %129 = arith.addf %128, %127 : vector<8x128xf32>
    %130 = arith.mulf %124, %129 : vector<8x128xf32>
    %c3_58 = arith.constant 3 : index
    %c0_59 = arith.constant 0 : index
    %c0_60 = arith.constant 0 : index
    %131 = vector.load %arg7[%c3_58, %c0_59, %c0_60] : memref<4x8x128xf32, #tpu.memory_space<vmem>>, vector<1x8x128xf32>
    %132 = vector.shape_cast %131 : vector<1x8x128xf32> to vector<8x128xf32>
    %133 = vector.shape_cast %130 : vector<8x128xf32> to vector<1x8x128xf32>
    tpu.vector_store %arg7[%c3_58, %c0_59, %c0_60], %133 {strides = array<i32>} : memref<4x8x128xf32, #tpu.memory_space<vmem>>, vector<1x8x128xf32>,
    %cst_61 = arith.constant dense<0.000000e+00> : vector<128xf32>
    %134 = vector.multi_reduction <add>, %130, %cst_61 [0] : vector<8x128xf32> to vector<128xf32>
    %135 = vector.shape_cast %134 : vector<128xf32> to vector<1x128xf32>
    %136 = arith.addf %104, %135 : vector<1x128xf32>
    %cst_62 = arith.constant 6.000000e+00 : f32
    %137 = arith.mulf %cst_62, %8 : f32
    %138 = vector.broadcast %137 : f32 to vector<1x128xf32>
    %139 = arith.subf %136, %138 : vector<1x128xf32>
    %cst_63 = arith.constant 1.250000e-01 : f32
    %140 = vector.broadcast %cst_63 : f32 to vector<1x128xf32>
    %141 = arith.mulf %139, %140 : vector<1x128xf32>
    %c0_64 = arith.constant 0 : index
    %c0_65 = arith.constant 0 : index
    %c0_66 = arith.constant 0 : index
    %142 = vector.load %arg7[%c0_64, %c0_65, %c0_66] : memref<4x8x128xf32, #tpu.memory_space<vmem>>, vector<1x8x128xf32>
    %143 = vector.shape_cast %142 : vector<1x8x128xf32> to vector<8x128xf32>
    %144 = vector.broadcast %141 : vector<1x128xf32> to vector<8x128xf32>
    %145 = arith.subf %143, %144 : vector<8x128xf32>
    %146 = arith.mulf %145, %145 : vector<8x128xf32>
    %cst_67 = arith.constant dense<0.000000e+00> : vector<128xf32>
    %147 = vector.multi_reduction <add>, %146, %cst_67 [0] : vector<8x128xf32> to vector<128xf32>
    %148 = vector.shape_cast %147 : vector<128xf32> to vector<1x128xf32>
    %c1_68 = arith.constant 1 : index
    %c0_69 = arith.constant 0 : index
    %c0_70 = arith.constant 0 : index
    %149 = vector.load %arg7[%c1_68, %c0_69, %c0_70] : memref<4x8x128xf32, #tpu.memory_space<vmem>>, vector<1x8x128xf32>
    %150 = vector.shape_cast %149 : vector<1x8x128xf32> to vector<8x128xf32>
    %151 = vector.broadcast %141 : vector<1x128xf32> to vector<8x128xf32>
    %152 = arith.subf %150, %151 : vector<8x128xf32>
    %153 = arith.mulf %152, %152 : vector<8x128xf32>
    %cst_71 = arith.constant dense<0.000000e+00> : vector<128xf32>
    %154 = vector.multi_reduction <add>, %153, %cst_71 [0] : vector<8x128xf32> to vector<128xf32>
    %155 = vector.shape_cast %154 : vector<128xf32> to vector<1x128xf32>
    %156 = arith.addf %148, %155 : vector<1x128xf32>
    %c2_72 = arith.constant 2 : index
    %c0_73 = arith.constant 0 : index
    %c0_74 = arith.constant 0 : index
    %157 = vector.load %arg7[%c2_72, %c0_73, %c0_74] : memref<4x8x128xf32, #tpu.memory_space<vmem>>, vector<1x8x128xf32>
    %158 = vector.shape_cast %157 : vector<1x8x128xf32> to vector<8x128xf32>
    %159 = vector.broadcast %141 : vector<1x128xf32> to vector<8x128xf32>
    %160 = arith.subf %158, %159 : vector<8x128xf32>
    %161 = arith.mulf %160, %160 : vector<8x128xf32>
    %cst_75 = arith.constant dense<0.000000e+00> : vector<128xf32>
    %162 = vector.multi_reduction <add>, %161, %cst_75 [0] : vector<8x128xf32> to vector<128xf32>
    %163 = vector.shape_cast %162 : vector<128xf32> to vector<1x128xf32>
    %164 = arith.addf %156, %163 : vector<1x128xf32>
    %c3_76 = arith.constant 3 : index
    %c0_77 = arith.constant 0 : index
    %c0_78 = arith.constant 0 : index
    %165 = vector.load %arg7[%c3_76, %c0_77, %c0_78] : memref<4x8x128xf32, #tpu.memory_space<vmem>>, vector<1x8x128xf32>
    %166 = vector.shape_cast %165 : vector<1x8x128xf32> to vector<8x128xf32>
    %167 = vector.broadcast %141 : vector<1x128xf32> to vector<8x128xf32>
    %168 = arith.subf %166, %167 : vector<8x128xf32>
    %169 = arith.mulf %168, %168 : vector<8x128xf32>
    %cst_79 = arith.constant dense<0.000000e+00> : vector<128xf32>
    %170 = vector.multi_reduction <add>, %169, %cst_79 [0] : vector<8x128xf32> to vector<128xf32>
    %171 = vector.shape_cast %170 : vector<128xf32> to vector<1x128xf32>
    %172 = arith.addf %164, %171 : vector<1x128xf32>
    %cst_80 = arith.constant 2.000000e+00 : f32
    %173 = vector.broadcast %cst_80 : f32 to vector<1x128xf32>
    %174 = arith.mulf %173, %141 : vector<1x128xf32>
    %175 = vector.broadcast %8 : f32 to vector<1x128xf32>
    %176 = arith.mulf %174, %175 : vector<1x128xf32>
    %177 = vector.broadcast %9 : f32 to vector<1x128xf32>
    %178 = arith.subf %177, %176 : vector<1x128xf32>
    %179 = arith.mulf %141, %141 : vector<1x128xf32>
    %cst_81 = arith.constant 4.000000e+00 : f32
    %180 = vector.broadcast %cst_81 : f32 to vector<1x128xf32>
    %181 = arith.mulf %180, %179 : vector<1x128xf32>
    %182 = arith.addf %178, %181 : vector<1x128xf32>
    %cst_82 = arith.constant 6.000000e+00 : f32
    %183 = vector.broadcast %cst_82 : f32 to vector<1x128xf32>
    %184 = arith.mulf %183, %182 : vector<1x128xf32>
    %185 = arith.subf %172, %184 : vector<1x128xf32>
    %cst_83 = arith.constant 1.250000e-01 : f32
    %186 = vector.broadcast %cst_83 : f32 to vector<1x128xf32>
    %187 = arith.mulf %185, %186 : vector<1x128xf32>
    %cst_84 = arith.constant 9.99999974E-6 : f32
    %188 = vector.broadcast %cst_84 : f32 to vector<1x128xf32>
    %189 = arith.addf %187, %188 : vector<1x128xf32>
    %190 = math.rsqrt %189 : vector<1x128xf32>
    %c0_85 = arith.constant 0 : index
    %c0_86 = arith.constant 0 : index
    %191 = vector.load %arg5[%c0_85, %c0_86] : memref<1x128xf32, #tpu.memory_space<vmem>>, vector<1x128xf32>
    %192 = arith.mulf %190, %191 : vector<1x128xf32>
    %c0_87 = arith.constant 0 : index
    %c0_88 = arith.constant 0 : index
    %193 = vector.load %arg6[%c0_87, %c0_88] : memref<1x128xf32, #tpu.memory_space<vmem>>, vector<1x128xf32>
    %194 = arith.mulf %141, %192 : vector<1x128xf32>
    %195 = arith.subf %193, %194 : vector<1x128xf32>
    %c0_89 = arith.constant 0 : index
    %c0_90 = arith.constant 0 : index
    %c0_91 = arith.constant 0 : index
    %196 = vector.load %arg7[%c0_89, %c0_90, %c0_91] : memref<4x8x128xf32, #tpu.memory_space<vmem>>, vector<1x8x128xf32>
    %197 = vector.shape_cast %196 : vector<1x8x128xf32> to vector<8x128xf32>
    %198 = vector.broadcast %192 : vector<1x128xf32> to vector<8x128xf32>
    %199 = arith.mulf %197, %198 : vector<8x128xf32>
    %200 = vector.broadcast %195 : vector<1x128xf32> to vector<8x128xf32>
    %201 = arith.addf %199, %200 : vector<8x128xf32>
    %c0_92 = arith.constant 0 : index
    %c0_93 = arith.constant 0 : index
    %c0_94 = arith.constant 0 : index
    %202 = vector.load %arg7[%c0_92, %c0_93, %c0_94] : memref<4x8x128xf32, #tpu.memory_space<vmem>>, vector<1x8x128xf32>
    %203 = vector.shape_cast %202 : vector<1x8x128xf32> to vector<8x128xf32>
    %204 = vector.shape_cast %201 : vector<8x128xf32> to vector<1x8x128xf32>
    tpu.vector_store %arg7[%c0_92, %c0_93, %c0_94], %204 {strides = array<i32>} : memref<4x8x128xf32, #tpu.memory_space<vmem>>, vector<1x8x128xf32>,
    %c1_95 = arith.constant 1 : index
    %c0_96 = arith.constant 0 : index
    %c0_97 = arith.constant 0 : index
    %205 = vector.load %arg7[%c1_95, %c0_96, %c0_97] : memref<4x8x128xf32, #tpu.memory_space<vmem>>, vector<1x8x128xf32>
    %206 = vector.shape_cast %205 : vector<1x8x128xf32> to vector<8x128xf32>
    %207 = vector.broadcast %192 : vector<1x128xf32> to vector<8x128xf32>
    %208 = arith.mulf %206, %207 : vector<8x128xf32>
    %209 = vector.broadcast %195 : vector<1x128xf32> to vector<8x128xf32>
    %210 = arith.addf %208, %209 : vector<8x128xf32>
    %c1_98 = arith.constant 1 : index
    %c0_99 = arith.constant 0 : index
    %c0_100 = arith.constant 0 : index
    %211 = vector.load %arg7[%c1_98, %c0_99, %c0_100] : memref<4x8x128xf32, #tpu.memory_space<vmem>>, vector<1x8x128xf32>
    %212 = vector.shape_cast %211 : vector<1x8x128xf32> to vector<8x128xf32>
    %213 = vector.shape_cast %210 : vector<8x128xf32> to vector<1x8x128xf32>
    tpu.vector_store %arg7[%c1_98, %c0_99, %c0_100], %213 {strides = array<i32>} : memref<4x8x128xf32, #tpu.memory_space<vmem>>, vector<1x8x128xf32>,
    %c2_101 = arith.constant 2 : index
    %c0_102 = arith.constant 0 : index
    %c0_103 = arith.constant 0 : index
    %214 = vector.load %arg7[%c2_101, %c0_102, %c0_103] : memref<4x8x128xf32, #tpu.memory_space<vmem>>, vector<1x8x128xf32>
    %215 = vector.shape_cast %214 : vector<1x8x128xf32> to vector<8x128xf32>
    %216 = vector.broadcast %192 : vector<1x128xf32> to vector<8x128xf32>
    %217 = arith.mulf %215, %216 : vector<8x128xf32>
    %218 = vector.broadcast %195 : vector<1x128xf32> to vector<8x128xf32>
    %219 = arith.addf %217, %218 : vector<8x128xf32>
    %c2_104 = arith.constant 2 : index
    %c0_105 = arith.constant 0 : index
    %c0_106 = arith.constant 0 : index
    %220 = vector.load %arg7[%c2_104, %c0_105, %c0_106] : memref<4x8x128xf32, #tpu.memory_space<vmem>>, vector<1x8x128xf32>
    %221 = vector.shape_cast %220 : vector<1x8x128xf32> to vector<8x128xf32>
    %222 = vector.shape_cast %219 : vector<8x128xf32> to vector<1x8x128xf32>
    tpu.vector_store %arg7[%c2_104, %c0_105, %c0_106], %222 {strides = array<i32>} : memref<4x8x128xf32, #tpu.memory_space<vmem>>, vector<1x8x128xf32>,
    %c3_107 = arith.constant 3 : index
    %c0_108 = arith.constant 0 : index
    %c0_109 = arith.constant 0 : index
    %223 = vector.load %arg7[%c3_107, %c0_108, %c0_109] : memref<4x8x128xf32, #tpu.memory_space<vmem>>, vector<1x8x128xf32>
    %224 = vector.shape_cast %223 : vector<1x8x128xf32> to vector<8x128xf32>
    %225 = vector.broadcast %192 : vector<1x128xf32> to vector<8x128xf32>
    %226 = arith.mulf %224, %225 : vector<8x128xf32>
    %227 = vector.broadcast %195 : vector<1x128xf32> to vector<8x128xf32>
    %228 = arith.addf %226, %227 : vector<8x128xf32>
    %c3_110 = arith.constant 3 : index
    %c0_111 = arith.constant 0 : index
    %c0_112 = arith.constant 0 : index
    %229 = vector.load %arg7[%c3_110, %c0_111, %c0_112] : memref<4x8x128xf32, #tpu.memory_space<vmem>>, vector<1x8x128xf32>
    %230 = vector.shape_cast %229 : vector<1x8x128xf32> to vector<8x128xf32>
    %231 = vector.shape_cast %228 : vector<8x128xf32> to vector<1x8x128xf32>
    tpu.vector_store %arg7[%c3_110, %c0_111, %c0_112], %231 {strides = array<i32>} : memref<4x8x128xf32, #tpu.memory_space<vmem>>, vector<1x8x128xf32>,
    return
  }
  func.func @transform_0(%arg0: i32) -> (i32, i32) {
    %c0_i32 = arith.constant 0 : i32
    %c0_i32_0 = arith.constant 0 : i32
    %c0_i32_1 = arith.constant 0 : i32
    return %c0_i32, %c0_i32_0 : i32, i32
  }
  func.func @transform_1(%arg0: i32) -> (i32, i32) {
    %c0_i32 = arith.constant 0 : i32
    %c0_i32_0 = arith.constant 0 : i32
    %c0_i32_1 = arith.constant 0 : i32
    return %c0_i32, %c0_i32_0 : i32, i32
  }
  func.func @transform_2(%arg0: i32) -> i32 {
    %c0_i32 = arith.constant 0 : i32
    %c0_i32_0 = arith.constant 0 : i32
    return %c0_i32 : i32
  }
  func.func @transform_3(%arg0: i32) -> i32 {
    %c0_i32 = arith.constant 0 : i32
    %c0_i32_0 = arith.constant 0 : i32
    return %c0_i32 : i32
  }
  func.func @transform_4(%arg0: i32) -> (i32, i32) {
    %c0_i32 = arith.constant 0 : i32
    %c0_i32_0 = arith.constant 0 : i32
    return %c0_i32, %arg0 : i32, i32
  }
  func.func @transform_5(%arg0: i32) -> (i32, i32) {
    %c0_i32 = arith.constant 0 : i32
    %c0_i32_0 = arith.constant 0 : i32
    return %c0_i32, %arg0 : i32, i32
  }
  func.func @transform_6(%arg0: i32) -> (i32, i32, i32) {
    %c0_i32 = arith.constant 0 : i32
    %c0_i32_0 = arith.constant 0 : i32
    %c0_i32_1 = arith.constant 0 : i32
    return %c0_i32, %c0_i32_0, %arg0 : i32, i32, i32
  }
}

</mosaic_0001>

<llo_original>
// kernel: tpu_custom_call.1
$region0: #{tpu_custom_call.1}
  #allocation0 [shape = 'u32[]', space=smem, size = 0x4, offset = 0x4, fixed_abs, tag = 'smem constant byte address 0x4 - core index']
  #allocation1 [shape = 'u32[72,128]{1,0:T(1,128)}', space=vmem, size = 0x9000, scoped, tag = 'internal scratch']
  %s0 = inlined_call_operand.hbm [shape: f32[8,256], index: 0, kind: input, shape index: {}]
  %s1 = inlined_call_operand.hbm [shape: f32[4,4], index: 1, kind: input, shape index: {}]
  %s2 = inlined_call_operand.vmem [shape: f32[4], index: 2, kind: input, shape index: {}]
  %s3 = inlined_call_operand.vmem [shape: f32[2], index: 3, kind: input, shape index: {}]
  %s4 = inlined_call_operand.vmem [shape: f32[1,128], index: 4, kind: input, shape index: {}]
  %s5 = inlined_call_operand.vmem [shape: f32[1,128], index: 5, kind: input, shape index: {}]
  %s6 = inlined_call_operand.hbm [shape: f32[4,8,128], index: 6, kind: output, shape index: {}]
  %s7 = sld [smem:[#allocation0]]
  $region50: #{tpu_custom_call.1} parent=0
    _
  %s9 = ssub.s32 1, %s7
  %s10 = scalar_select 0, %s9, %s7
  $region1: #{tpu_custom_call.1} parent=0
    #allocation2 [shape = 'u8[8192]{0}', space=vmem, size = 0x2000, scoped, tag = 'input window, operand 0, single buffered']
    #allocation3 [shape = 's32[1]{0}', space=sflag, size = 0x4, scoped, tag = 'scoped memory for tpu_custom_call.1']
    #allocation4 [shape = 's32[1]{0}', space=sflag, size = 0x4, scoped, tag = 'scoped memory for tpu_custom_call.1']
    #allocation5 [shape = 's32[1]{0}', space=sflag, size = 0x4, scoped, tag = 'scoped memory for tpu_custom_call.1']
    #allocation6 [shape = 's32[1]{0}', space=sflag, size = 0x4, scoped, tag = 'scoped memory for tpu_custom_call.1']
    #allocation7 [shape = 'u8[2048]{0}', space=smem, size = 0x800, scoped, tag = 'input window, operand 1, single buffered']
    #allocation8 [shape = 'u8[512]{0}', space=smem, size = 0x200, scoped, tag = 'input window, operand 2, single buffered']
    #allocation9 [shape = 'u8[512]{0}', space=smem, size = 0x200, scoped, tag = 'input window, operand 3, single buffered']
    #allocation10 [shape = 's32[1]{0}', space=sflag, size = 0x4, scoped, tag = 'scoped memory for tpu_custom_call.1']
    #allocation11 [shape = 'u8[16384]{0}', space=vmem, size = 0x4000, scoped, tag = 'output window, operand 0, single buffered']
    %11 = vsyncpa [#allocation3], 0
    %12 = vsyncpa [#allocation5], 0
    %13 = vsyncpa [#allocation6], 0
    %14 = vsyncpa [#allocation10], 0
    %15 = vsyncpa [#allocation4], 0
    // Predicated region
    $region2: #{tpu_custom_call.1} parent=1 // pred_check
      _
    $region3: #{tpu_custom_call.1} parent=1 // pred_check_branch
      %17 = sbr.rel (0) target = $region5
    $region4: #{tpu_custom_call.1} parent=1 // pred_region
      %19 = vsyncadd [#allocation3], 0
      %s21 = sshll.u32 %s0, 4
      %s22 = int_to_ptr.hbm [resolvable:$true] %s21
      %s23 = sshll.u32 [#allocation2], 4
      %s24 = int_to_ptr.vmem [resolvable:$true] %s23
      %26 = dma.hbm_to_vmem [thread:$0]  %s22, 256, %s24, [#allocation3]
    $region5: #{tpu_custom_call.1} parent=1 // pred_fallthru
      _
    // Predicated region
    $region6: #{tpu_custom_call.1} parent=1 // pred_check
      _
    $region7: #{tpu_custom_call.1} parent=1 // pred_check_branch
      %28 = sbr.rel (0) target = $region9
    $region8: #{tpu_custom_call.1} parent=1 // pred_region
      %30 = vsyncadd [#allocation5], 0
      %s32 = sshll.u32 %s1, 4
      %s33 = int_to_ptr.hbm [resolvable:$true] %s32
      %35 = dma.hbm_to_smem %s33, 64, [#allocation7], [#allocation5]
    $region9: #{tpu_custom_call.1} parent=1 // pred_fallthru
      _
    // Predicated region
    $region10: #{tpu_custom_call.1} parent=1 // pred_check
      _
    $region11: #{tpu_custom_call.1} parent=1 // pred_check_branch
      %37 = sbr.rel (0) target = $region13
    $region12: #{tpu_custom_call.1} parent=1 // pred_region
      %39 = vsyncadd [#allocation6], 0
      %s41 = sshll.u32 %s2, 4
      %s42 = int_to_ptr.vmem [resolvable:$true] %s41
      %44 = dma.vmem_to_smem %s42, 16, [#allocation8], [#allocation6]
    $region13: #{tpu_custom_call.1} parent=1 // pred_fallthru
      _
    // Predicated region
    $region14: #{tpu_custom_call.1} parent=1 // pred_check
      _
    $region15: #{tpu_custom_call.1} parent=1 // pred_check_branch
      %46 = sbr.rel (0) target = $region17
    $region16: #{tpu_custom_call.1} parent=1 // pred_region
      %48 = vsyncadd [#allocation10], 0
      %s50 = sshll.u32 %s3, 4
      %s51 = int_to_ptr.vmem [resolvable:$true] %s50
      %53 = dma.vmem_to_smem %s51, 16, [#allocation9], [#allocation10]
    $region17: #{tpu_custom_call.1} parent=1 // pred_fallthru
      _
    // Predicated region
    $region18: #{tpu_custom_call.1} parent=1 // pred_check
      _
    $region19: #{tpu_custom_call.1} parent=1 // pred_check_branch
      %55 = sbr.rel (0) target = $region21
    $region20: #{tpu_custom_call.1} parent=1 // pred_region
      _
    $region21: #{tpu_custom_call.1} parent=1 // pred_fallthru
      _
    // Predicated region
    $region22: #{tpu_custom_call.1} parent=1 // pred_check
      _
    $region23: #{tpu_custom_call.1} parent=1 // pred_check_branch
      %57 = sbr.rel (0) target = $region25
    $region24: #{tpu_custom_call.1} parent=1 // pred_region
      _
    $region25: #{tpu_custom_call.1} parent=1 // pred_fallthru
      _
    // Predicated region
    $region26: #{tpu_custom_call.1} parent=1 // pred_check
      _
    $region27: #{tpu_custom_call.1} parent=1 // pred_check_branch
      %59 = sbr.rel (0) target = $region29
    $region28: #{tpu_custom_call.1} parent=1 // pred_region
      %61 = dma.done [#allocation3], 256
    $region29: #{tpu_custom_call.1} parent=1 // pred_fallthru
      _
    // Predicated region
    $region30: #{tpu_custom_call.1} parent=1 // pred_check
      _
    $region31: #{tpu_custom_call.1} parent=1 // pred_check_branch
      %63 = sbr.rel (0) target = $region33
    $region32: #{tpu_custom_call.1} parent=1 // pred_region
      %65 = dma.done [#allocation5], 64
    $region33: #{tpu_custom_call.1} parent=1 // pred_fallthru
      _
    // Predicated region
    $region34: #{tpu_custom_call.1} parent=1 // pred_check
      _
    $region35: #{tpu_custom_call.1} parent=1 // pred_check_branch
      %67 = sbr.rel (0) target = $region37
    $region36: #{tpu_custom_call.1} parent=1 // pred_region
      %69 = dma.done [#allocation6], 16
    $region37: #{tpu_custom_call.1} parent=1 // pred_fallthru
      _
    // Predicated region
    $region38: #{tpu_custom_call.1} parent=1 // pred_check
      _
    $region39: #{tpu_custom_call.1} parent=1 // pred_check_branch
      %71 = sbr.rel (0) target = $region41
    $region40: #{tpu_custom_call.1} parent=1 // pred_region
      %73 = dma.done [#allocation10], 16
    $region41: #{tpu_custom_call.1} parent=1 // pred_fallthru
      _
    %74 = sfence
    %s75 = smul.u32 0, 128
    %s76 = sshra.s32 %s75, 7
    %s77 = sand.u32 %s75, 127
    %s78 = smul.addr %s76, 8
    %s79 = scalar_lea.vmem [#allocation2], %s78
    %v80 = vld [vmem:[%s79] sm:$0xff]
    %v81 = vld [vmem:[%s79 + $0x8] sm:$0xff]
    %s82 = sld [smem:[#allocation9]]
    %s83 = sld [smem:[#allocation9 + $0x1]]
    %s84 = sld [smem:[#allocation7]]
    %v85 = vstv %s84
    %v86 = vmul.f32 %v80, %v85
    %s87 = sld [smem:[#allocation8]]
    %v88 = vstv %s87
    %v89 = vadd.f32 %v86, %v88
    %s90 = sld [smem:[#allocation7 + $0x1]]
    %v91 = vstv %s90
    %v92 = vmul.f32 %v80, %v91
    %v93 = vmul.f32 %v81, %v91
    %96 = vrot.lane.b32.xlu0 %v92, 127
    %v97 = vpop.permute.xlu0 %96
    %98 = vrot.lane.b32.xlu0 %v93, 127
    %v99 = vpop.permute.xlu0 %98
    %vm100 = vcmask 1039360
    %v101 = vsel %vm100, %v97, %v99
    %v103 = vadd.f32 %v89, %v101
    %s104 = sld [smem:[#allocation7 + $0x2]]
    %v105 = vstv %s104
    %v106 = vmul.f32 %v80, %v105
    %v107 = vmul.f32 %v81, %v105
    %110 = vrot.lane.b32.xlu0 %v106, 126
    %v111 = vpop.permute.xlu0 %110
    %112 = vrot.lane.b32.xlu0 %v107, 126
    %v113 = vpop.permute.xlu0 %112
    %vm114 = vcmask 1031168
    %v115 = vsel %vm114, %v111, %v113
    %v117 = vadd.f32 %v103, %v115
    %s118 = sld [smem:[#allocation7 + $0x3]]
    %v119 = vstv %s118
    %v120 = vmul.f32 %v80, %v119
    %v121 = vmul.f32 %v81, %v119
    %124 = vrot.lane.b32.xlu0 %v120, 125
    %v125 = vpop.permute.xlu0 %124
    %126 = vrot.lane.b32.xlu0 %v121, 125
    %v127 = vpop.permute.xlu0 %126
    %vm128 = vcmask 1022976
    %v129 = vsel %vm128, %v125, %v127
    %v131 = vadd.f32 %v117, %v129
    %v132 = vmul.f32 %v131, 0.5
    %v133 = vmul.f32 %v131, 0.70710677
    %v134 = vmul.f32 %v133, %v133
    %v135 = vmin.f32 16.0, %v134
    %v136 = vmul.f32 %v135, 2.1237322e-06
    %v137 = vadd.f32 %v136, 0.00028619796
    %v138 = vmul.f32 %v135, %v137
    %v139 = vadd.f32 %v138, 0.0036580483
    %v140 = vmul.f32 %v135, %v139
    %v141 = vadd.f32 %v140, 0.05243302
    %v142 = vmul.f32 %v135, %v141
    %v143 = vadd.f32 %v142, 0.18741608
    %v144 = vmul.f32 %v135, %v143
    %v145 = vadd.f32 %v144, 1.1283791
    %v146 = vmul.f32 %v133, %v145
    %v147 = vmul.f32 %v135, 3.8918573e-05
    %v148 = vadd.f32 %v147, 0.001143296
    %v149 = vmul.f32 %v135, %v148
    %v150 = vadd.f32 %v149, 0.014752088
    %v151 = vmul.f32 %v135, %v150
    %v152 = vadd.f32 %v151, 0.112945676
    %v153 = vmul.f32 %v135, %v152
    %v154 = vadd.f32 %v153, 0.4994258
    %v155 = vmul.f32 %v135, %v154
    %v156 = vadd.f32 %v155, 1.0
    %v157 = vrcp.pop %v156
    %v158 = vmul.f32 %v156, %v157
    %v159 = vsub.f32 1.0, %v158
    %v160 = vmul.f32 %v157, %v159
    %v161 = vadd.f32 %v157, %v160
    %vm162 = vweird.f32 %v156
    %vm163 = vweird.f32 %v157
    %vm164 = vmor %vm162, %vm163
    %v165 = vsel %vm164, %v157, %v161
    %v166 = vand.u32 2147483647, %v156
    %vm167 = vcmp.eq.f32.partialorder %v166, 8.507059e+37
    %v168 = vand.u32 %v156, 2147483648
    %v169 = vor.u32 1.1754944e-38, %v168
    %v170 = vsel %vm167, %v169, %v165
    %v171 = vmul.f32 %v146, %v170
    %v172 = vmin.f32 %v171, 1.0
    %v173 = vmax.f32 %v172, -1.0
    %v174 = vadd.f32 %v173, 1.0
    %v175 = vmul.f32 %v132, %v174
    %176 = vst [vmem:[#allocation11] sm:$0xff] %v175
    %v177 = vrot.slane %v175, 4
    %v178 = vadd.f32 %v175, %v177
    %v179 = vrot.slane %v178, 2
    %v180 = vadd.f32 %v178, %v179
    %v181 = vrot.slane %v180, 1
    %v182 = vadd.f32 %v180, %v181
    %s183 = sld [smem:[#allocation7 + $0x80]]
    %v184 = vstv %s183
    %v185 = vmul.f32 %v80, %v184
    %s186 = sld [smem:[#allocation8 + $0x1]]
    %v187 = vstv %s186
    %v188 = vadd.f32 %v185, %v187
    %s189 = sld [smem:[#allocation7 + $0x81]]
    %v190 = vstv %s189
    %v191 = vmul.f32 %v80, %v190
    %v192 = vmul.f32 %v81, %v190
    %195 = vrot.lane.b32.xlu0 %v191, 127
    %v196 = vpop.permute.xlu0 %195
    %197 = vrot.lane.b32.xlu0 %v192, 127
    %v198 = vpop.permute.xlu0 %197
    %v199 = vsel %vm100, %v196, %v198
    %v201 = vadd.f32 %v188, %v199
    %s202 = sld [smem:[#allocation7 + $0x82]]
    %v203 = vstv %s202
    %v204 = vmul.f32 %v80, %v203
    %v205 = vmul.f32 %v81, %v203
    %208 = vrot.lane.b32.xlu0 %v204, 126
    %v209 = vpop.permute.xlu0 %208
    %210 = vrot.lane.b32.xlu0 %v205, 126
    %v211 = vpop.permute.xlu0 %210
    %v212 = vsel %vm114, %v209, %v211
    %v214 = vadd.f32 %v201, %v212
    %s215 = sld [smem:[#allocation7 + $0x83]]
    %v216 = vstv %s215
    %v217 = vmul.f32 %v80, %v216
    %v218 = vmul.f32 %v81, %v216
    %221 = vrot.lane.b32.xlu0 %v217, 125
    %v222 = vpop.permute.xlu0 %221
    %223 = vrot.lane.b32.xlu0 %v218, 125
    %v224 = vpop.permute.xlu0 %223
    %v225 = vsel %vm128, %v222, %v224
    %v227 = vadd.f32 %v214, %v225
    %v228 = vmul.f32 %v227, 0.5
    %v229 = vmul.f32 %v227, 0.70710677
    %v230 = vmul.f32 %v229, %v229
    %v231 = vmin.f32 16.0, %v230
    %v232 = vmul.f32 %v231, 2.1237322e-06
    %v233 = vadd.f32 %v232, 0.00028619796
    %v234 = vmul.f32 %v231, %v233
    %v235 = vadd.f32 %v234, 0.0036580483
    %v236 = vmul.f32 %v231, %v235
    %v237 = vadd.f32 %v236, 0.05243302
    %v238 = vmul.f32 %v231, %v237
    %v239 = vadd.f32 %v238, 0.18741608
    %v240 = vmul.f32 %v231, %v239
    %v241 = vadd.f32 %v240, 1.1283791
    %v242 = vmul.f32 %v229, %v241
    %v243 = vmul.f32 %v231, 3.8918573e-05
    %v244 = vadd.f32 %v243, 0.001143296
    %v245 = vmul.f32 %v231, %v244
    %v246 = vadd.f32 %v245, 0.014752088
    %v247 = vmul.f32 %v231, %v246
    %v248 = vadd.f32 %v247, 0.112945676
    %v249 = vmul.f32 %v231, %v248
    %v250 = vadd.f32 %v249, 0.4994258
    %v251 = vmul.f32 %v231, %v250
    %v252 = vadd.f32 %v251, 1.0
    %v253 = vrcp.pop %v252
    %v254 = vmul.f32 %v252, %v253
    %v255 = vsub.f32 1.0, %v254
    %v256 = vmul.f32 %v253, %v255
    %v257 = vadd.f32 %v253, %v256
    %vm258 = vweird.f32 %v252
    %vm259 = vweird.f32 %v253
    %vm260 = vmor %vm258, %vm259
    %v261 = vsel %vm260, %v253, %v257
    %v262 = vand.u32 2147483647, %v252
    %vm263 = vcmp.eq.f32.partialorder %v262, 8.507059e+37
    %v264 = vand.u32 %v252, 2147483648
    %v265 = vor.u32 1.1754944e-38, %v264
    %v266 = vsel %vm263, %v265, %v261
    %v267 = vmul.f32 %v242, %v266
    %v268 = vmin.f32 %v267, 1.0
    %v269 = vmax.f32 %v268, -1.0
    %v270 = vadd.f32 %v269, 1.0
    %v271 = vmul.f32 %v228, %v270
    %s272 = scalar_lea.vmem [#allocation11], 8
    %273 = vst [vmem:[%s272] sm:$0xff] %v271
    %v274 = vrot.slane %v271, 4
    %v275 = vadd.f32 %v271, %v274
    %v276 = vrot.slane %v275, 2
    %v277 = vadd.f32 %v275, %v276
    %v278 = vrot.slane %v277, 1
    %v279 = vadd.f32 %v277, %v278
    %v280 = vadd.f32 %v182, %v279
    %s281 = sld [smem:[#allocation7 + $0x100]]
    %v282 = vstv %s281
    %v283 = vmul.f32 %v80, %v282
    %s284 = sld [smem:[#allocation8 + $0x2]]
    %v285 = vstv %s284
    %v286 = vadd.f32 %v283, %v285
    %s287 = sld [smem:[#allocation7 + $0x101]]
    %v288 = vstv %s287
    %v289 = vmul.f32 %v80, %v288
    %v290 = vmul.f32 %v81, %v288
    %293 = vrot.lane.b32.xlu0 %v289, 127
    %v294 = vpop.permute.xlu0 %293
    %295 = vrot.lane.b32.xlu0 %v290, 127
    %v296 = vpop.permute.xlu0 %295
    %v297 = vsel %vm100, %v294, %v296
    %v299 = vadd.f32 %v286, %v297
    %s300 = sld [smem:[#allocation7 + $0x102]]
    %v301 = vstv %s300
    %v302 = vmul.f32 %v80, %v301
    %v303 = vmul.f32 %v81, %v301
    %306 = vrot.lane.b32.xlu0 %v302, 126
    %v307 = vpop.permute.xlu0 %306
    %308 = vrot.lane.b32.xlu0 %v303, 126
    %v309 = vpop.permute.xlu0 %308
    %v310 = vsel %vm114, %v307, %v309
    %v312 = vadd.f32 %v299, %v310
    %s313 = sld [smem:[#allocation7 + $0x103]]
    %v314 = vstv %s313
    %v315 = vmul.f32 %v80, %v314
    %v316 = vmul.f32 %v81, %v314
    %319 = vrot.lane.b32.xlu0 %v315, 125
    %v320 = vpop.permute.xlu0 %319
    %321 = vrot.lane.b32.xlu0 %v316, 125
    %v322 = vpop.permute.xlu0 %321
    %v323 = vsel %vm128, %v320, %v322
    %v325 = vadd.f32 %v312, %v323
    %v326 = vmul.f32 %v325, 0.5
    %v327 = vmul.f32 %v325, 0.70710677
    %v328 = vmul.f32 %v327, %v327
    %v329 = vmin.f32 16.0, %v328
    %v330 = vmul.f32 %v329, 2.1237322e-06
    %v331 = vadd.f32 %v330, 0.00028619796
    %v332 = vmul.f32 %v329, %v331
    %v333 = vadd.f32 %v332, 0.0036580483
    %v334 = vmul.f32 %v329, %v333
    %v335 = vadd.f32 %v334, 0.05243302
    %v336 = vmul.f32 %v329, %v335
    %v337 = vadd.f32 %v336, 0.18741608
    %v338 = vmul.f32 %v329, %v337
    %v339 = vadd.f32 %v338, 1.1283791
    %v340 = vmul.f32 %v327, %v339
    %v341 = vmul.f32 %v329, 3.8918573e-05
    %v342 = vadd.f32 %v341, 0.001143296
    %v343 = vmul.f32 %v329, %v342
    %v344 = vadd.f32 %v343, 0.014752088
    %v345 = vmul.f32 %v329, %v344
    %v346 = vadd.f32 %v345, 0.112945676
    %v347 = vmul.f32 %v329, %v346
    %v348 = vadd.f32 %v347, 0.4994258
    %v349 = vmul.f32 %v329, %v348
    %v350 = vadd.f32 %v349, 1.0
    %v351 = vrcp.pop %v350
    %v352 = vmul.f32 %v350, %v351
    %v353 = vsub.f32 1.0, %v352
    %v354 = vmul.f32 %v351, %v353
    %v355 = vadd.f32 %v351, %v354
    %vm356 = vweird.f32 %v350
    %vm357 = vweird.f32 %v351
    %vm358 = vmor %vm356, %vm357
    %v359 = vsel %vm358, %v351, %v355
    %v360 = vand.u32 2147483647, %v350
    %vm361 = vcmp.eq.f32.partialorder %v360, 8.507059e+37
    %v362 = vand.u32 %v350, 2147483648
    %v363 = vor.u32 1.1754944e-38, %v362
    %v364 = vsel %vm361, %v363, %v359
    %v365 = vmul.f32 %v340, %v364
    %v366 = vmin.f32 %v365, 1.0
    %v367 = vmax.f32 %v366, -1.0
    %v368 = vadd.f32 %v367, 1.0
    %v369 = vmul.f32 %v326, %v368
    %s370 = scalar_lea.vmem [#allocation11], 16
    %371 = vst [vmem:[%s370] sm:$0xff] %v369
    %v372 = vrot.slane %v369, 4
    %v373 = vadd.f32 %v369, %v372
    %v374 = vrot.slane %v373, 2
    %v375 = vadd.f32 %v373, %v374
    %v376 = vrot.slane %v375, 1
    %v377 = vadd.f32 %v375, %v376
    %v378 = vadd.f32 %v280, %v377
    %s379 = sld [smem:[#allocation7 + $0x180]]
    %v380 = vstv %s379
    %v381 = vmul.f32 %v80, %v380
    %s382 = sld [smem:[#allocation8 + $0x3]]
    %v383 = vstv %s382
    %v384 = vadd.f32 %v381, %v383
    %s385 = sld [smem:[#allocation7 + $0x181]]
    %v386 = vstv %s385
    %v387 = vmul.f32 %v80, %v386
    %v388 = vmul.f32 %v81, %v386
    %391 = vrot.lane.b32.xlu0 %v387, 127
    %v392 = vpop.permute.xlu0 %391
    %393 = vrot.lane.b32.xlu0 %v388, 127
    %v394 = vpop.permute.xlu0 %393
    %v395 = vsel %vm100, %v392, %v394
    %v397 = vadd.f32 %v384, %v395
    %s398 = sld [smem:[#allocation7 + $0x182]]
    %v399 = vstv %s398
    %v400 = vmul.f32 %v80, %v399
    %v401 = vmul.f32 %v81, %v399
    %404 = vrot.lane.b32.xlu0 %v400, 126
    %v405 = vpop.permute.xlu0 %404
    %406 = vrot.lane.b32.xlu0 %v401, 126
    %v407 = vpop.permute.xlu0 %406
    %v408 = vsel %vm114, %v405, %v407
    %v410 = vadd.f32 %v397, %v408
    %s411 = sld [smem:[#allocation7 + $0x183]]
    %v412 = vstv %s411
    %v413 = vmul.f32 %v80, %v412
    %v414 = vmul.f32 %v81, %v412
    %417 = vrot.lane.b32.xlu0 %v413, 125
    %v418 = vpop.permute.xlu0 %417
    %419 = vrot.lane.b32.xlu0 %v414, 125
    %v420 = vpop.permute.xlu0 %419
    %v421 = vsel %vm128, %v418, %v420
    %v423 = vadd.f32 %v410, %v421
    %v424 = vmul.f32 %v423, 0.5
    %v425 = vmul.f32 %v423, 0.70710677
    %v426 = vmul.f32 %v425, %v425
    %v427 = vmin.f32 16.0, %v426
    %v428 = vmul.f32 %v427, 2.1237322e-06
    %v429 = vadd.f32 %v428, 0.00028619796
    %v430 = vmul.f32 %v427, %v429
    %v431 = vadd.f32 %v430, 0.0036580483
    %v432 = vmul.f32 %v427, %v431
    %v433 = vadd.f32 %v432, 0.05243302
    %v434 = vmul.f32 %v427, %v433
    %v435 = vadd.f32 %v434, 0.18741608
    %v436 = vmul.f32 %v427, %v435
    %v437 = vadd.f32 %v436, 1.1283791
    %v438 = vmul.f32 %v425, %v437
    %v439 = vmul.f32 %v427, 3.8918573e-05
    %v440 = vadd.f32 %v439, 0.001143296
    %v441 = vmul.f32 %v427, %v440
    %v442 = vadd.f32 %v441, 0.014752088
    %v443 = vmul.f32 %v427, %v442
    %v444 = vadd.f32 %v443, 0.112945676
    %v445 = vmul.f32 %v427, %v444
    %v446 = vadd.f32 %v445, 0.4994258
    %v447 = vmul.f32 %v427, %v446
    %v448 = vadd.f32 %v447, 1.0
    %v449 = vrcp.pop %v448
    %v450 = vmul.f32 %v448, %v449
    %v451 = vsub.f32 1.0, %v450
    %v452 = vmul.f32 %v449, %v451
    %v453 = vadd.f32 %v449, %v452
    %vm454 = vweird.f32 %v448
    %vm455 = vweird.f32 %v449
    %vm456 = vmor %vm454, %vm455
    %v457 = vsel %vm456, %v449, %v453
    %v458 = vand.u32 2147483647, %v448
    %vm459 = vcmp.eq.f32.partialorder %v458, 8.507059e+37
    %v460 = vand.u32 %v448, 2147483648
    %v461 = vor.u32 1.1754944e-38, %v460
    %v462 = vsel %vm459, %v461, %v457
    %v463 = vmul.f32 %v438, %v462
    %v464 = vmin.f32 %v463, 1.0
    %v465 = vmax.f32 %v464, -1.0
    %v466 = vadd.f32 %v465, 1.0
    %v467 = vmul.f32 %v424, %v466
    %s468 = scalar_lea.vmem [#allocation11], 24
    %469 = vst [vmem:[%s468] sm:$0xff] %v467
    %v470 = vrot.slane %v467, 4
    %v471 = vadd.f32 %v467, %v470
    %v472 = vrot.slane %v471, 2
    %v473 = vadd.f32 %v471, %v472
    %v474 = vrot.slane %v473, 1
    %v475 = vadd.f32 %v473, %v474
    %v476 = vadd.f32 %v378, %v475
    %s477 = smul.f32 %s82, 6.0
    %v478 = vstv %s477
    %v479 = vsub.f32 %v476, %v478
    %v480 = vmul.f32 %v479, 0.125
    %v481 = vld [vmem:[#allocation11] sm:$0xff]
    %v482 = vsub.f32 %v481, %v480
    %v483 = vmul.f32 %v482, %v482
    %v484 = vrot.slane %v483, 4
    %v485 = vadd.f32 %v483, %v484
    %v486 = vrot.slane %v485, 2
    %v487 = vadd.f32 %v485, %v486
    %v488 = vrot.slane %v487, 1
    %v489 = vadd.f32 %v487, %v488
    %v490 = vld [vmem:[%s272] sm:$0xff]
    %v491 = vsub.f32 %v490, %v480
    %v492 = vmul.f32 %v491, %v491
    %v493 = vrot.slane %v492, 4
    %v494 = vadd.f32 %v492, %v493
    %v495 = vrot.slane %v494, 2
    %v496 = vadd.f32 %v494, %v495
    %v497 = vrot.slane %v496, 1
    %v498 = vadd.f32 %v496, %v497
    %v499 = vadd.f32 %v489, %v498
    %v500 = vld [vmem:[%s370] sm:$0xff]
    %v501 = vsub.f32 %v500, %v480
    %v502 = vmul.f32 %v501, %v501
    %v503 = vrot.slane %v502, 4
    %v504 = vadd.f32 %v502, %v503
    %v505 = vrot.slane %v504, 2
    %v506 = vadd.f32 %v504, %v505
    %v507 = vrot.slane %v506, 1
    %v508 = vadd.f32 %v506, %v507
    %v509 = vadd.f32 %v499, %v508
    %v510 = vld [vmem:[%s468] sm:$0xff]
    %v511 = vsub.f32 %v510, %v480
    %v512 = vmul.f32 %v511, %v511
    %v513 = vrot.slane %v512, 4
    %v514 = vadd.f32 %v512, %v513
    %v515 = vrot.slane %v514, 2
    %v516 = vadd.f32 %v514, %v515
    %v517 = vrot.slane %v516, 1
    %v518 = vadd.f32 %v516, %v517
    %v519 = vadd.f32 %v509, %v518
    %v520 = vmul.f32 %v480, 2.0
    %v521 = vstv %s82
    %v522 = vmul.f32 %v520, %v521
    %v523 = vstv %s83
    %v524 = vsub.f32 %v523, %v522
    %v525 = vmul.f32 %v480, %v480
    %v526 = vmul.f32 %v525, 4.0
    %v527 = vadd.f32 %v524, %v526
    %v528 = vmul.f32 %v527, 6.0
    %v529 = vsub.f32 %v519, %v528
    %v530 = vmul.f32 %v529, 0.125
    %v531 = vadd.f32 %v530, 1e-05
    %v532 = vrsqrt.pop %v531
    %v533 = vmul.f32 %v532, %v531
    %v534 = vmul.f32 %v533, %v532
    %v535 = vmul.f32 0.5, %v534
    %v536 = vsub.f32 1.5, %v535
    %v537 = vmul.f32 %v532, %v536
    %vm538 = vweird.f32 %v531
    %vm539 = vweird.f32 %v532
    %vm540 = vmor %vm538, %vm539
    %v541 = vsel %vm540, %v532, %v537
    %v542 = vld [vmem:[%s4] sm:$0x1]
    %v543 = vmul.f32 %v541, %v542
    %v544 = vld [vmem:[%s5] sm:$0x1]
    %v545 = vmul.f32 %v480, %v543
    %v546 = vsub.f32 %v544, %v545
    %v547 = vperm.slane %v543, 0
    %v548 = vmul.f32 %v481, %v547
    %v550 = vperm.slane %v546, 0
    %v552 = vadd.f32 %v548, %v550
    %553 = vst [vmem:[#allocation11] sm:$0xff] %v552
    %v554 = vld [vmem:[%s272] sm:$0xff]
    %v555 = vmul.f32 %v554, %v547
    %v556 = vadd.f32 %v555, %v550
    %557 = vst [vmem:[%s272] sm:$0xff] %v556
    %v558 = vld [vmem:[%s370] sm:$0xff]
    %v559 = vmul.f32 %v558, %v547
    %v560 = vadd.f32 %v559, %v550
    %561 = vst [vmem:[%s370] sm:$0xff] %v560
    %v562 = vld [vmem:[%s468] sm:$0xff]
    %v563 = vmul.f32 %v562, %v547
    %v564 = vadd.f32 %v563, %v550
    %565 = vst [vmem:[%s468] sm:$0xff] %v564
    // Predicated region
    $region42: #{tpu_custom_call.1} parent=1 // pred_check
      _
    $region43: #{tpu_custom_call.1} parent=1 // pred_check_branch
      %567 = sbr.rel (0) target = $region45
    $region44: #{tpu_custom_call.1} parent=1 // pred_region
      %569 = vsyncadd [#allocation4], 0
      %s570 = sshll.u32 [#allocation11], 4
      %s571 = int_to_ptr.vmem [resolvable:$true] %s570
      %s572 = sshll.u32 %s6, 4
      %s573 = int_to_ptr.hbm [resolvable:$true] %s572
      %578 = dma.vmem_to_hbm [thread:$0]  %s571, 512, %s573, [#allocation4], 128, 128, 8
    $region45: #{tpu_custom_call.1} parent=1 // pred_fallthru
      _
    // Predicated region
    $region46: #{tpu_custom_call.1} parent=1 // pred_check
      _
    $region47: #{tpu_custom_call.1} parent=1 // pred_check_branch
      %580 = sbr.rel (0) target = $region49
    $region48: #{tpu_custom_call.1} parent=1 // pred_region
      %582 = dma.done [#allocation4], 512
    $region49: #{tpu_custom_call.1} parent=1 // pred_fallthru
      _
    %583 = vsyncpa [#allocation3], 1
    %584 = vsyncpa [#allocation4], 1
    %585 = vsyncpa [#allocation5], 1
    %586 = vsyncpa [#allocation6], 1
    %587 = vsyncpa [#allocation10], 1

</llo_original>
